<compile_context>
chip_gen: v5e
topology: v5e:2x2
jax: 0.10.0
libtpu: 0.0.40
codegen_flags: <defaults>
</compile_context>

<pallas_src>
import functools

import jax
import jax.numpy as jnp
from jax.experimental import pallas as pl
from jax.experimental.pallas import tpu as pltpu

IGNORE_INDEX = -100
NUM_CORES = 2  # leading "parallel" grid axis -> uses both TensorCores on v7x


def _round_up(x, m):
    return (x + m - 1) // m * m


def _pick_vmem_limit():
    """Scoped-VMEM limit: ~3/4 of physical, capped, with a safe fallback."""
    try:
        phys = int(pltpu.get_tpu_info().vmem_capacity_bytes)
        return max(32 * 1024 * 1024, min(3 * phys // 4, 96 * 1024 * 1024))
    except Exception:
        return 48 * 1024 * 1024


def _ce_kernel(logits_ref, tgt_ref, sum_ref, cnt_ref,
               m_run, l_run, pick_run, sum_acc, cnt_acc,
               *, tc, c_total, needs_col_mask):
    """One (row-tile, class-chunk) step of masked cross-entropy.

    Grid = (core, row_tile i, class_chunk c); c is innermost.

    logits_ref: (TR, TC) native-dtype logits chunk
    tgt_ref:    (TR, 1) int32 targets (-100 marks ignored / padded rows)
    sum_ref:    (1, 8, 128) f32 per-core output (core's NLL sum)
    cnt_ref:    (1, 8, 128) f32 per-core output (core's valid-token count)
    m_run/l_run/pick_run: (TR, 1) f32 online-LSE state across class chunks
    sum_acc/cnt_acc:      (TR, 1) f32 running per-row sums across row tiles
    """
    i = pl.program_id(1)
    c = pl.program_id(2)
    nc = pl.num_programs(2)

    @pl.when((i == 0) & (c == 0))
    def _init_core():
        sum_acc[...] = jnp.zeros_like(sum_acc)
        cnt_acc[...] = jnp.zeros_like(cnt_acc)

    @pl.when(c == 0)
    def _init_row_tile():
        m_run[...] = jnp.full_like(m_run, -jnp.inf)
        l_run[...] = jnp.zeros_like(l_run)
        pick_run[...] = jnp.zeros_like(pick_run)

    x = logits_ref[...]                      # (TR, TC), native dtype (no upcast)
    tgt = tgt_ref[...]                       # (TR, 1) int32

    # Chunk-local lane index; compare against the chunk-shifted target so no
    # global (TR, C) iota + add is built.  Ignored rows (tgt = -100) and rows
    # whose target lives in another chunk never match.
    col = jax.lax.broadcasted_iota(jnp.int32, x.shape, 1)
    tgt_local = tgt - c * tc                 # (TR, 1)

    if needs_col_mask:
        # Tail chunk extends past C: out-of-bounds lanes carry garbage.
        lane_ok = col < (c_total - c * tc)
        x_for_max = jnp.where(lane_ok, x, jnp.array(-jnp.inf, x.dtype))
    else:
        lane_ok = None
        x_for_max = x

    # Pass 1 (native dtype, packed bf16 on v6e/v7x): chunk max.
    m_c = jnp.max(x_for_max, axis=-1, keepdims=True).astype(jnp.float32)

    # Pass 2 (native dtype): gather the target logit via one-hot select; at
    # most one non-zero per row per chunk, so the sum is exact.  Accumulate
    # in f32.
    picked_c = jnp.sum(
        jnp.where(col == tgt_local, x, jnp.zeros([], x.dtype)),
        axis=-1, keepdims=True).astype(jnp.float32)
    pick_run[...] += picked_c

    # Pass 3 (the only f32 pass): online sum-exp update.  The f32 upcast of x
    # has a single consumer, so it streams through vregs (no VMEM spill).
    m_old = m_run[...]
    m_new = jnp.maximum(m_old, m_c)
    xs = x.astype(jnp.float32) - m_new
    if needs_col_mask:
        e = jnp.where(lane_ok, jnp.exp(xs), 0.0)
    else:
        e = jnp.exp(xs)
    l_run[...] = l_run[...] * jnp.exp(m_old - m_new) + jnp.sum(
        e, axis=-1, keepdims=True)
    m_run[...] = m_new

    @pl.when(c == nc - 1)
    def _row_tile_done():
        # nll = logsumexp(x) - x[target]; garbage / ignored rows are masked
        # by valid (select, so NaN/inf-safe).
        nll = m_run[...] + jnp.log(l_run[...]) - pick_run[...]
        valid = tgt != IGNORE_INDEX
        sum_acc[...] += jnp.where(valid, nll, 0.0)
        cnt_acc[...] += valid.astype(jnp.float32)

    @pl.when((i == pl.num_programs(1) - 1) & (c == nc - 1))
    def _finalize():
        sum_ref[...] = jnp.full(sum_ref.shape, jnp.sum(sum_acc[...]),
                                jnp.float32)
        cnt_ref[...] = jnp.full(cnt_ref.shape, jnp.sum(cnt_acc[...]),
                                jnp.float32)


@functools.partial(jax.jit, static_argnames=("block_bytes", "chunk_c"))
def pretrain_loss(y_pred, seq, *, block_bytes=4 * 1024 * 1024, chunk_c=2048):
    """Pallas implementation of PretrainLoss.forward.

    y_pred: (B, L, C) float logits (class dim last, as in the PyTorch module
            before its transpose(1, 2)).
    seq:    (B, L_full) int targets; only the first L columns are used,
            entries equal to -100 are ignored.
    Returns {'loss': scalar float32}.
    """
    assert chunk_c % 128 == 0, "chunk_c must be a multiple of 128"
    B, L, C = y_pred.shape
    y = seq[:, :L]

    logits = y_pred.reshape(B * L, C)                  # native dtype, no upcast
    targets = y.reshape(B * L, 1).astype(jnp.int32)

    N = B * L
    # Rows must be a multiple of 8 (sublane).  Typical B*L already is; this
    # (tiny, at most 7 rows) pad is only taken for odd shapes.
    N8 = _round_up(N, 8)
    if N8 != N:
        logits = jnp.pad(logits, ((0, N8 - N), (0, 0)))
        targets = jnp.pad(targets, ((0, N8 - N), (0, 0)),
                          constant_values=IGNORE_INDEX)

    # Class chunking: bound the per-step block to (tr, tc) regardless of C so
    # row tiles stay large and all temporaries stay vreg/VMEM-friendly.
    if C <= chunk_c:
        tc = C
        num_chunks = 1
        needs_col_mask = False
    else:
        tc = chunk_c
        num_chunks = pl.cdiv(C, tc)
        needs_col_mask = (C % tc) != 0

    # Row tile sized so each logits block is ~block_bytes, multiple of 8.
    itemsize = jnp.dtype(y_pred.dtype).itemsize
    row_bytes = tc * itemsize
    tr = max(8, min(1024, (block_bytes // max(row_bytes, 1)) // 8 * 8))
    tr = min(tr, N8)

    tiles_total = pl.cdiv(N8, tr)
    tiles_per_core = pl.cdiv(tiles_total, NUM_CORES)
    Np = NUM_CORES * tiles_per_core * tr

    # Only the tiny targets array is padded to the padded grid extent; the
    # big logits array is never copied.  Tail / out-of-range rows contribute
    # nothing because their targets are IGNORE_INDEX.
    if Np != N8:
        targets = jnp.pad(targets, ((0, Np - N8), (0, 0)),
                          constant_values=IGNORE_INDEX)

    last_row_block = tiles_total - 1

    def logits_map(core, i, c):
        # Clamp so a fully out-of-range tile re-reads the last valid block
        # (its targets are all IGNORE_INDEX, so it contributes nothing).
        return (jnp.minimum(core * tiles_per_core + i, last_row_block), c)

    def tgt_map(core, i, c):
        # Same block index across the c axis -> fetched once per row tile.
        return (core * tiles_per_core + i, 0)

    kernel = functools.partial(_ce_kernel, tc=tc, c_total=C,
                               needs_col_mask=needs_col_mask)

    loss_sum, count = pl.pallas_call(
        kernel,
        out_shape=(
            jax.ShapeDtypeStruct((NUM_CORES, 8, 128), jnp.float32),
            jax.ShapeDtypeStruct((NUM_CORES, 8, 128), jnp.float32),
        ),
        grid_spec=pltpu.PrefetchScalarGridSpec(
            num_scalar_prefetch=0,
            grid=(NUM_CORES, tiles_per_core, num_chunks),
            in_specs=[
                pl.BlockSpec((tr, tc), logits_map),
                pl.BlockSpec((tr, 1), tgt_map),
            ],
            out_specs=[
                pl.BlockSpec((1, 8, 128), lambda core, i, c: (core, 0, 0)),
                pl.BlockSpec((1, 8, 128), lambda core, i, c: (core, 0, 0)),
            ],
            scratch_shapes=[
                pltpu.VMEM((tr, 1), jnp.float32),   # m_run
                pltpu.VMEM((tr, 1), jnp.float32),   # l_run
                pltpu.VMEM((tr, 1), jnp.float32),   # pick_run
                pltpu.VMEM((tr, 1), jnp.float32),   # sum_acc
                pltpu.VMEM((tr, 1), jnp.float32),   # cnt_acc
            ],
        ),
        compiler_params=pltpu.CompilerParams(
            dimension_semantics=("parallel", "arbitrary", "arbitrary"),
            vmem_limit_bytes=_pick_vmem_limit(),
        ),
    )(logits, targets)

    total = jnp.sum(loss_sum[:, 0, 0])
    n_valid = jnp.sum(count[:, 0, 0])
    # mean over valid tokens (matches nn.CrossEntropyLoss reduction='mean';
    # NaN if every target is ignored, same as PyTorch).
    loss = total / n_valid
    return {"loss": loss}


def _reference(y_pred, seq):
    """Plain-JAX reference for sanity checking."""
    B, L, C = y_pred.shape
    y = seq[:, :L].reshape(-1)
    x = y_pred.reshape(-1, C).astype(jnp.float32)
    lse = jax.scipy.special.logsumexp(x, axis=-1)
    safe_y = jnp.where(y == IGNORE_INDEX, 0, y)
    picked = jnp.take_along_axis(x, safe_y[:, None], axis=-1)[:, 0]
    nll = lse - picked
    valid = y != IGNORE_INDEX
    return jnp.sum(jnp.where(valid, nll, 0.0)) / jnp.sum(valid)


if __name__ == "__main__":
    key = jax.random.PRNGKey(0)

    # Case 1: basic (vocab multiple of 8, single class chunk).
    k1, k2, key = jax.random.split(key, 3)
    B, L, L_full, C = 2, 8, 12, 32
    y_pred = jax.random.normal(k1, (B, L, C), dtype=jnp.float32)
    seq = jax.random.randint(k2, (B, L_full), 0, C, dtype=jnp.int32)
    seq = seq.at[0, 2].set(IGNORE_INDEX).at[1, 5].set(IGNORE_INDEX)
    out = pretrain_loss(y_pred, seq)
    loss = jax.block_until_ready(out["loss"])
    ref = _reference(y_pred, seq)
    assert jnp.allclose(loss, ref, rtol=1e-5, atol=1e-5), (loss, ref)

    # Case 2: odd vocab, not a multiple of 128 (single chunk = full C).
    k1, k2, key = jax.random.split(key, 3)
    C2 = 37
    y_pred2 = jax.random.normal(k1, (B, L, C2), dtype=jnp.float32)
    seq2 = jax.random.randint(k2, (B, L_full), 0, C2, dtype=jnp.int32)
    seq2 = seq2.at[1, 0].set(IGNORE_INDEX)
    out2 = pretrain_loss(y_pred2, seq2)
    loss2 = jax.block_until_ready(out2["loss"])
    ref2 = _reference(y_pred2, seq2)
    assert jnp.allclose(loss2, ref2, rtol=1e-5, atol=1e-5), (loss2, ref2)

    # Case 3: exercise the class-chunk online-LSE path with a masked tail
    # chunk (C=300, chunk=128 -> 3 chunks, last one 44 valid lanes).
    k1, k2, key = jax.random.split(key, 3)
    C3 = 300
    y_pred3 = jax.random.normal(k1, (B, L, C3), dtype=jnp.float32)
    seq3 = jax.random.randint(k2, (B, L_full), 0, C3, dtype=jnp.int32)
    seq3 = seq3.at[0, 7].set(IGNORE_INDEX)
    out3 = pretrain_loss(y_pred3, seq3, chunk_c=128)
    loss3 = jax.block_until_ready(out3["loss"])
    ref3 = _reference(y_pred3, seq3)
    assert jnp.allclose(loss3, ref3, rtol=1e-5, atol=1e-5), (loss3, ref3)

    # Case 4: bf16 logits through the chunked path (native-dtype max/pick,
    # f32 exp/log) against the f32 reference.
    y_pred4 = y_pred3.astype(jnp.bfloat16)
    out4 = pretrain_loss(y_pred4, seq3, chunk_c=128)
    loss4 = jax.block_until_ready(out4["loss"])
    ref4 = _reference(y_pred4, seq3)
    assert jnp.allclose(loss4, ref4, rtol=1e-2, atol=1e-2), (loss4, ref4)

    print("KERNEL_OK")
</pallas_src>

<mosaic_0001>
module attributes {stable_mosaic.version = 11 : i64} {
  func.func @_ce_kernel(%arg0: i32, %arg1: i32, %arg2: i32, %arg3: memref<16x32xf32, #tpu.memory_space<vmem>>, %arg4: memref<16x1xi32, #tpu.memory_space<vmem>>, %arg5: memref<1x8x128xf32, #tpu.memory_space<vmem>>, %arg6: memref<1x8x128xf32, #tpu.memory_space<vmem>>, %arg7: memref<16x1xf32, #tpu.memory_space<vmem>>, %arg8: memref<16x1xf32, #tpu.memory_space<vmem>>, %arg9: memref<16x1xf32, #tpu.memory_space<vmem>>, %arg10: memref<16x1xf32, #tpu.memory_space<vmem>>, %arg11: memref<16x1xf32, #tpu.memory_space<vmem>>) attributes {dimension_semantics = [#tpu.dimension_semantics<parallel>, #tpu.dimension_semantics<arbitrary>, #tpu.dimension_semantics<arbitrary>], iteration_bounds = array<i64: 2, 1, 1>, scalar_prefetch = 0 : i64, scratch_operands = 5 : i64, tpu.core_type = #tpu.core_type<tc>, window_params = [{transform_indices = @transform_0, window_bounds = array<i64: 16, 32>}, {transform_indices = @transform_1, window_bounds = array<i64: 16, 1>}, {transform_indices = @transform_2, window_bounds = array<i64: 1, 8, 128>}, {transform_indices = @transform_3, window_bounds = array<i64: 1, 8, 128>}]} {
    %c0_i32 = arith.constant 0 : i32
    %0 = arith.cmpi eq, %arg1, %c0_i32 : i32
    %c0_i32_0 = arith.constant 0 : i32
    %1 = arith.cmpi eq, %arg2, %c0_i32_0 : i32
    %2 = arith.andi %0, %1 : i1
    %3 = arith.extui %2 : i1 to i32
    %c0_i32_1 = arith.constant 0 : i32
    %4 = arith.cmpi ne, %3, %c0_i32_1 : i32
    scf.if %4 {
      %cst_27 = arith.constant 0.000000e+00 : f32
      %47 = vector.broadcast %cst_27 : f32 to vector<16x1xf32>
      %c0_28 = arith.constant 0 : index
      %c0_29 = arith.constant 0 : index
      %48 = vector.load %arg10[%c0_28, %c0_29] : memref<16x1xf32, #tpu.memory_space<vmem>>, vector<16x1xf32>
      tpu.vector_store %arg10[%c0_28, %c0_29], %47 {strides = array<i32>} : memref<16x1xf32, #tpu.memory_space<vmem>>, vector<16x1xf32>,
      %cst_30 = arith.constant 0.000000e+00 : f32
      %49 = vector.broadcast %cst_30 : f32 to vector<16x1xf32>
      %c0_31 = arith.constant 0 : index
      %c0_32 = arith.constant 0 : index
      %50 = vector.load %arg11[%c0_31, %c0_32] : memref<16x1xf32, #tpu.memory_space<vmem>>, vector<16x1xf32>
      tpu.vector_store %arg11[%c0_31, %c0_32], %49 {strides = array<i32>} : memref<16x1xf32, #tpu.memory_space<vmem>>, vector<16x1xf32>,
    } else {
    }
    %c0_i32_2 = arith.constant 0 : i32
    %5 = arith.cmpi eq, %arg2, %c0_i32_2 : i32
    %6 = arith.extui %5 : i1 to i32
    %c0_i32_3 = arith.constant 0 : i32
    %7 = arith.cmpi ne, %6, %c0_i32_3 : i32
    scf.if %7 {
      %cst_27 = arith.constant 0xFF800000 : f32
      %47 = vector.broadcast %cst_27 : f32 to vector<16x1xf32>
      %c0_28 = arith.constant 0 : index
      %c0_29 = arith.constant 0 : index
      %48 = vector.load %arg7[%c0_28, %c0_29] : memref<16x1xf32, #tpu.memory_space<vmem>>, vector<16x1xf32>
      tpu.vector_store %arg7[%c0_28, %c0_29], %47 {strides = array<i32>} : memref<16x1xf32, #tpu.memory_space<vmem>>, vector<16x1xf32>,
      %cst_30 = arith.constant 0.000000e+00 : f32
      %49 = vector.broadcast %cst_30 : f32 to vector<16x1xf32>
      %c0_31 = arith.constant 0 : index
      %c0_32 = arith.constant 0 : index
      %50 = vector.load %arg8[%c0_31, %c0_32] : memref<16x1xf32, #tpu.memory_space<vmem>>, vector<16x1xf32>
      tpu.vector_store %arg8[%c0_31, %c0_32], %49 {strides = array<i32>} : memref<16x1xf32, #tpu.memory_space<vmem>>, vector<16x1xf32>,
      %cst_33 = arith.constant 0.000000e+00 : f32
      %51 = vector.broadcast %cst_33 : f32 to vector<16x1xf32>
      %c0_34 = arith.constant 0 : index
      %c0_35 = arith.constant 0 : index
      %52 = vector.load %arg9[%c0_34, %c0_35] : memref<16x1xf32, #tpu.memory_space<vmem>>, vector<16x1xf32>
      tpu.vector_store %arg9[%c0_34, %c0_35], %51 {strides = array<i32>} : memref<16x1xf32, #tpu.memory_space<vmem>>, vector<16x1xf32>,
    } else {
    }
    %c0 = arith.constant 0 : index
    %c0_4 = arith.constant 0 : index
    %8 = vector.load %arg3[%c0, %c0_4] : memref<16x32xf32, #tpu.memory_space<vmem>>, vector<16x32xf32>
    %c0_5 = arith.constant 0 : index
    %c0_6 = arith.constant 0 : index
    %9 = vector.load %arg4[%c0_5, %c0_6] : memref<16x1xi32, #tpu.memory_space<vmem>>, vector<16x1xi32>
    %10 = tpu.iota {dimensions = array<i32: 1>} : vector<16x32xi32>
    %c32_i32 = arith.constant 32 : i32
    %11 = arith.muli %arg2, %c32_i32 : i32
    %12 = vector.broadcast %11 : i32 to vector<16x1xi32>
    %13 = arith.subi %9, %12 : vector<16x1xi32>
    %cst = arith.constant dense<0xFF800000> : vector<16xf32>
    %14 = vector.multi_reduction <maximumf>, %8, %cst [1] : vector<16x32xf32> to vector<16xf32>
    %15 = vector.shape_cast %14 : vector<16xf32> to vector<16x1xf32>
    %16 = vector.broadcast %13 : vector<16x1xi32> to vector<16x32xi32>
    %17 = arith.cmpi eq, %10, %16 : vector<16x32xi32>
    %cst_7 = arith.constant 0.000000e+00 : f32
    %18 = vector.broadcast %cst_7 : f32 to vector<16x32xf32>
    %19 = arith.select %17, %8, %18 : vector<16x32xi1>, vector<16x32xf32>
    %cst_8 = arith.constant dense<0.000000e+00> : vector<16xf32>
    %20 = vector.multi_reduction <add>, %19, %cst_8 [1] : vector<16x32xf32> to vector<16xf32>
    %21 = vector.shape_cast %20 : vector<16xf32> to vector<16x1xf32>
    %c0_9 = arith.constant 0 : index
    %c0_10 = arith.constant 0 : index
    %22 = vector.load %arg9[%c0_9, %c0_10] : memref<16x1xf32, #tpu.memory_space<vmem>>, vector<16x1xf32>
    %23 = arith.addf %22, %21 : vector<16x1xf32>
    %c0_11 = arith.constant 0 : index
    %c0_12 = arith.constant 0 : index
    %24 = vector.load %arg9[%c0_11, %c0_12] : memref<16x1xf32, #tpu.memory_space<vmem>>, vector<16x1xf32>
    tpu.vector_store %arg9[%c0_11, %c0_12], %23 {strides = array<i32>} : memref<16x1xf32, #tpu.memory_space<vmem>>, vector<16x1xf32>,
    %c0_13 = arith.constant 0 : index
    %c0_14 = arith.constant 0 : index
    %25 = vector.load %arg7[%c0_13, %c0_14] : memref<16x1xf32, #tpu.memory_space<vmem>>, vector<16x1xf32>
    %26 = arith.maximumf %25, %15 : vector<16x1xf32>
    %27 = vector.broadcast %26 : vector<16x1xf32> to vector<16x32xf32>
    %28 = arith.subf %8, %27 : vector<16x32xf32>
    %29 = math.exp %28 : vector<16x32xf32>
    %c0_15 = arith.constant 0 : index
    %c0_16 = arith.constant 0 : index
    %30 = vector.load %arg8[%c0_15, %c0_16] : memref<16x1xf32, #tpu.memory_space<vmem>>, vector<16x1xf32>
    %31 = arith.subf %25, %26 : vector<16x1xf32>
    %32 = math.exp %31 : vector<16x1xf32>
    %33 = arith.mulf %30, %32 : vector<16x1xf32>
    %cst_17 = arith.constant dense<0.000000e+00> : vector<16xf32>
    %34 = vector.multi_reduction <add>, %29, %cst_17 [1] : vector<16x32xf32> to vector<16xf32>
    %35 = vector.shape_cast %34 : vector<16xf32> to vector<16x1xf32>
    %36 = arith.addf %33, %35 : vector<16x1xf32>
    %c0_18 = arith.constant 0 : index
    %c0_19 = arith.constant 0 : index
    %37 = vector.load %arg8[%c0_18, %c0_19] : memref<16x1xf32, #tpu.memory_space<vmem>>, vector<16x1xf32>
    tpu.vector_store %arg8[%c0_18, %c0_19], %36 {strides = array<i32>} : memref<16x1xf32, #tpu.memory_space<vmem>>, vector<16x1xf32>,
    %c0_20 = arith.constant 0 : index
    %c0_21 = arith.constant 0 : index
    %38 = vector.load %arg7[%c0_20, %c0_21] : memref<16x1xf32, #tpu.memory_space<vmem>>, vector<16x1xf32>
    tpu.vector_store %arg7[%c0_20, %c0_21], %26 {strides = array<i32>} : memref<16x1xf32, #tpu.memory_space<vmem>>, vector<16x1xf32>,
    %c0_i32_22 = arith.constant 0 : i32
    %39 = arith.cmpi eq, %arg2, %c0_i32_22 : i32
    %40 = arith.extui %39 : i1 to i32
    %c0_i32_23 = arith.constant 0 : i32
    %41 = arith.cmpi ne, %40, %c0_i32_23 : i32
    scf.if %41 {
      %c0_27 = arith.constant 0 : index
      %c0_28 = arith.constant 0 : index
      %47 = vector.load %arg7[%c0_27, %c0_28] : memref<16x1xf32, #tpu.memory_space<vmem>>, vector<16x1xf32>
      %c0_29 = arith.constant 0 : index
      %c0_30 = arith.constant 0 : index
      %48 = vector.load %arg8[%c0_29, %c0_30] : memref<16x1xf32, #tpu.memory_space<vmem>>, vector<16x1xf32>
      %49 = math.log %48 : vector<16x1xf32>
      %50 = arith.addf %47, %49 : vector<16x1xf32>
      %c0_31 = arith.constant 0 : index
      %c0_32 = arith.constant 0 : index
      %51 = vector.load %arg9[%c0_31, %c0_32] : memref<16x1xf32, #tpu.memory_space<vmem>>, vector<16x1xf32>
      %52 = arith.subf %50, %51 : vector<16x1xf32>
      %c-100_i32 = arith.constant -100 : i32
      %53 = vector.broadcast %c-100_i32 : i32 to vector<16x1xi32>
      %54 = arith.cmpi ne, %9, %53 : vector<16x1xi32>
      %c0_33 = arith.constant 0 : index
      %c0_34 = arith.constant 0 : index
      %55 = vector.load %arg10[%c0_33, %c0_34] : memref<16x1xf32, #tpu.memory_space<vmem>>, vector<16x1xf32>
      %cst_35 = arith.constant 0.000000e+00 : f32
      %56 = vector.broadcast %cst_35 : f32 to vector<16x1xf32>
      %57 = arith.select %54, %52, %56 : vector<16x1xi1>, vector<16x1xf32>
      %58 = arith.addf %55, %57 : vector<16x1xf32>
      %c0_36 = arith.constant 0 : index
      %c0_37 = arith.constant 0 : index
      %59 = vector.load %arg10[%c0_36, %c0_37] : memref<16x1xf32, #tpu.memory_space<vmem>>, vector<16x1xf32>
      tpu.vector_store %arg10[%c0_36, %c0_37], %58 {strides = array<i32>} : memref<16x1xf32, #tpu.memory_space<vmem>>, vector<16x1xf32>,
      %c0_38 = arith.constant 0 : index
      %c0_39 = arith.constant 0 : index
      %60 = vector.load %arg11[%c0_38, %c0_39] : memref<16x1xf32, #tpu.memory_space<vmem>>, vector<16x1xf32>
      %61 = arith.extui %54 : vector<16x1xi1> to vector<16x1xi32>
      %62 = arith.sitofp %61 : vector<16x1xi32> to vector<16x1xf32>
      %63 = arith.addf %60, %62 : vector<16x1xf32>
      %c0_40 = arith.constant 0 : index
      %c0_41 = arith.constant 0 : index
      %64 = vector.load %arg11[%c0_40, %c0_41] : memref<16x1xf32, #tpu.memory_space<vmem>>, vector<16x1xf32>
      tpu.vector_store %arg11[%c0_40, %c0_41], %63 {strides = array<i32>} : memref<16x1xf32, #tpu.memory_space<vmem>>, vector<16x1xf32>,
    } else {
    }
    %c0_i32_24 = arith.constant 0 : i32
    %42 = arith.cmpi eq, %arg1, %c0_i32_24 : i32
    %c0_i32_25 = arith.constant 0 : i32
    %43 = arith.cmpi eq, %arg2, %c0_i32_25 : i32
    %44 = arith.andi %42, %43 : i1
    %45 = arith.extui %44 : i1 to i32
    %c0_i32_26 = arith.constant 0 : i32
    %46 = arith.cmpi ne, %45, %c0_i32_26 : i32
    scf.if %46 {
      %c0_27 = arith.constant 0 : index
      %c0_28 = arith.constant 0 : index
      %47 = vector.load %arg10[%c0_27, %c0_28] : memref<16x1xf32, #tpu.memory_space<vmem>>, vector<16x1xf32>
      %48 = vector.shape_cast %47 : vector<16x1xf32> to vector<1x16x1xf32>
      %cst_29 = arith.constant dense<0.000000e+00> : vector<1xf32>
      %49 = vector.multi_reduction <add>, %48, %cst_29 [1, 2] : vector<1x16x1xf32> to vector<1xf32>
      %50 = vector.shape_cast %49 : vector<1xf32> to vector<1x1x1xf32>
      %51 = vector.extract %50[0, 0, 0] : f32 from vector<1x1x1xf32>
      %52 = vector.broadcast %51 : f32 to vector<1x8x128xf32>
      %c0_30 = arith.constant 0 : index
      %c0_31 = arith.constant 0 : index
      %c0_32 = arith.constant 0 : index
      %53 = vector.load %arg5[%c0_30, %c0_31, %c0_32] : memref<1x8x128xf32, #tpu.memory_space<vmem>>, vector<1x8x128xf32>
      tpu.vector_store %arg5[%c0_30, %c0_31, %c0_32], %52 {strides = array<i32>} : memref<1x8x128xf32, #tpu.memory_space<vmem>>, vector<1x8x128xf32>,
      %c0_33 = arith.constant 0 : index
      %c0_34 = arith.constant 0 : index
      %54 = vector.load %arg11[%c0_33, %c0_34] : memref<16x1xf32, #tpu.memory_space<vmem>>, vector<16x1xf32>
      %55 = vector.shape_cast %54 : vector<16x1xf32> to vector<1x16x1xf32>
      %cst_35 = arith.constant dense<0.000000e+00> : vector<1xf32>
      %56 = vector.multi_reduction <add>, %55, %cst_35 [1, 2] : vector<1x16x1xf32> to vector<1xf32>
      %57 = vector.shape_cast %56 : vector<1xf32> to vector<1x1x1xf32>
      %58 = vector.extract %57[0, 0, 0] : f32 from vector<1x1x1xf32>
      %59 = vector.broadcast %58 : f32 to vector<1x8x128xf32>
      %c0_36 = arith.constant 0 : index
      %c0_37 = arith.constant 0 : index
      %c0_38 = arith.constant 0 : index
      %60 = vector.load %arg6[%c0_36, %c0_37, %c0_38] : memref<1x8x128xf32, #tpu.memory_space<vmem>>, vector<1x8x128xf32>
      tpu.vector_store %arg6[%c0_36, %c0_37, %c0_38], %59 {strides = array<i32>} : memref<1x8x128xf32, #tpu.memory_space<vmem>>, vector<1x8x128xf32>,
    } else {
    }
    return
  }
  func.func @transform_0(%arg0: i32, %arg1: i32, %arg2: i32) -> (i32, i32) {
    %c1_i32 = arith.constant 1 : i32
    %0 = arith.muli %arg0, %c1_i32 : i32
    %1 = arith.addi %0, %arg1 : i32
    %c0_i32 = arith.constant 0 : i32
    %2 = arith.minsi %1, %c0_i32 : i32
    %c0_i32_0 = arith.constant 0 : i32
    return %2, %arg2 : i32, i32
  }
  func.func @transform_1(%arg0: i32, %arg1: i32, %arg2: i32) -> (i32, i32) {
    %c1_i32 = arith.constant 1 : i32
    %0 = arith.muli %arg0, %c1_i32 : i32
    %1 = arith.addi %0, %arg1 : i32
    %c0_i32 = arith.constant 0 : i32
    %c0_i32_0 = arith.constant 0 : i32
    return %1, %c0_i32 : i32, i32
  }
  func.func @transform_2(%arg0: i32, %arg1: i32, %arg2: i32) -> (i32, i32, i32) {
    %c0_i32 = arith.constant 0 : i32
    %c0_i32_0 = arith.constant 0 : i32
    %c0_i32_1 = arith.constant 0 : i32
    return %arg0, %c0_i32, %c0_i32_0 : i32, i32, i32
  }
  func.func @transform_3(%arg0: i32, %arg1: i32, %arg2: i32) -> (i32, i32, i32) {
    %c0_i32 = arith.constant 0 : i32
    %c0_i32_0 = arith.constant 0 : i32
    %c0_i32_1 = arith.constant 0 : i32
    return %arg0, %c0_i32, %c0_i32_0 : i32, i32, i32
  }
}

</mosaic_0001>

<llo_original>
// kernel: pretrain_loss.1
$region0: #{pretrain_loss.1}
  #allocation0 [shape = 'u32[]', space=smem, size = 0x4, offset = 0x4, fixed_abs, tag = 'smem constant byte address 0x4 - core index']
  #allocation1 [shape = 'u32[72,128]{1,0:T(1,128)}', space=vmem, size = 0x9000, scoped, tag = 'internal scratch']
  #allocation2 [shape = 'f32[16,1]{1,0:T(8,128)}', space=vmem, size = 0x2000, scoped, tag = 'scratch operand']
  #allocation3 [shape = 'f32[16,1]{1,0:T(8,128)}', space=vmem, size = 0x2000, scoped, tag = 'scratch operand']
  #allocation4 [shape = 'f32[16,1]{1,0:T(8,128)}', space=vmem, size = 0x2000, scoped, tag = 'scratch operand']
  #allocation5 [shape = 'f32[16,1]{1,0:T(8,128)}', space=vmem, size = 0x2000, scoped, tag = 'scratch operand']
  #allocation6 [shape = 'f32[16,1]{1,0:T(8,128)}', space=vmem, size = 0x2000, scoped, tag = 'scratch operand']
  %s0 = inlined_call_operand.vmem [shape: f32[16,32], index: 0, kind: input, shape index: {}]
  %s1 = inlined_call_operand.vmem [shape: s32[32,1], index: 1, kind: input, shape index: {}]
  %s2 = inlined_call_operand.vmem [shape: f32[2,8,128], index: 2, kind: output, shape index: {0}]
  %s3 = inlined_call_operand.vmem [shape: f32[2,8,128], index: 3, kind: output, shape index: {1}]
  %4 = xla_tuple %s2, %s3
  %s5 = sld [smem:[#allocation0]]
  $region65: #{pretrain_loss.1} parent=0
    _
  %s7 = ssub.s32 1, %s5
  %s8 = scalar_select 0, %s7, %s5
  loop: start=0, step=1, limit=4
  $region2: #{pretrain_loss.1} parent=0 // loop_pre_header
    _
  $region3: #{pretrain_loss.1} parent=0 // loop_header
    %s10 = sphi 0, %s14
    %p11 = scmp.ge.s32.totalorder %s10, 4
    %s17 = sphi 0, %s36
    %s18 = sphi 0, %s32
    %s19 = sphi 0, %s28
    %s20 = sphi 0, %s17
    %s21 = sphi 0, %s18
    %s22 = sphi 0, %s19
    %s23 = sphi 0, %s20
    %s24 = sphi 0, %s21
    %s25 = sphi 0, %s22
    %s47 = sphi 0, %s49
    %s50 = sphi 0, %s47
    %s51 = sphi 0, %s50
    %s67 = sphi 0, %s51
    %s75 = sphi 0, %s77
    %s78 = sphi 0, %s75
    %s79 = sphi 0, %s78
    %s95 = sphi 0, %s79
    %s101 = sphi 0, %s103
    %s104 = sphi 0, %s101
    %s105 = sphi 0, %s104
    %s121 = sphi 0, %s105
    %s127 = sphi 0, %s129
    %s130 = sphi 0, %s127
    %s131 = sphi 0, %s130
    %s147 = sphi 0, %s131
  $region4: #{pretrain_loss.1} parent=0 // loop_header_branch
    %13 = sbr.rel (%p11) target = $region8
  $region5: #{pretrain_loss.1} parent=0 // loop_body
    %s15 = ssub.s32 %s10, 1
    %s16 = ssub.s32 %s10, 2
    %s26 = sadd.s32 1, %s19
    %p27 = scmp.ge.s32.totalorder %s26, 1
    %s28 = scalar_select %p27, 0, %s26
    %s29 = sadd.s32 1, %s18
    %s30 = scalar_select %p27, %s29, %s18
    %p31 = scmp.ge.s32.totalorder %s30, 1
    %s32 = scalar_select %p31, 0, %s30
    %s33 = sadd.s32 1, %s17
    %s34 = scalar_select %p31, %s33, %s17
    %p35 = scmp.ge.s32.totalorder %s34, 2
    %s36 = scalar_select %p35, 0, %s34
    %s37 = sadd.s32 %s17, %s18
    %p38 = scmp.lt.s32.totalorder %s37, 0
    %s39 = scalar_select %p38, %s37, 0
    %s40 = sadd.s32 %s36, %s32
    %p41 = scmp.lt.s32.totalorder %s40, 0
    %s42 = scalar_select %p41, %s40, 0
    %s43 = ssub.s32 %s39, %s42
    %s44 = ssub.s32 %s19, %s28
    %s45 = sor.u32 %s43, %s44
    %p46 = scmp.eq.s32.totalorder %s45, 0
    %s48 = sadd.s32 %s47, 1
    %s49 = scalar_select %p46, %s47, %s48
    %p52 = pneg %p46
    %p53 = scmp.eq.s32.totalorder %s10, 1
    %p54 = por %p52, %p53
    %p55 = scmp.ne.s32.totalorder %s47, %s50
    %p56 = scmp.eq.s32.totalorder %s10, 0
    %p57 = por %p55, %p56
    %p58 = scmp.ne.s32.totalorder %s47, %s50
    %p59 = scmp.eq.s32.totalorder %s15, 1
    %p60 = por %p58, %p59
    %p61 = scmp.ne.s32.totalorder %s50, %s51
    %p62 = scmp.eq.s32.totalorder %s15, 0
    %p63 = por %p61, %p62
    %p64 = scmp.ne.s32.totalorder %s50, %s51
    %p65 = scmp.eq.s32.totalorder %s16, 1
    %p66 = por %p64, %p65
    %p68 = scmp.ne.s32.totalorder %s51, %s67
    %p69 = scmp.eq.s32.totalorder %s16, 0
    %p70 = por %p68, %p69
    %s71 = sadd.s32 %s17, %s18
    %s72 = sadd.s32 %s36, %s32
    %s73 = ssub.s32 %s71, %s72
    %p74 = scmp.eq.s32.totalorder %s73, 0
    %s76 = sadd.s32 %s75, 1
    %s77 = scalar_select %p74, %s75, %s76
    %p80 = pneg %p74
    %p81 = scmp.eq.s32.totalorder %s10, 1
    %p82 = por %p80, %p81
    %p83 = scmp.ne.s32.totalorder %s75, %s78
    %p84 = scmp.eq.s32.totalorder %s10, 0
    %p85 = por %p83, %p84
    %p86 = scmp.ne.s32.totalorder %s75, %s78
    %p87 = scmp.eq.s32.totalorder %s15, 1
    %p88 = por %p86, %p87
    %p89 = scmp.ne.s32.totalorder %s78, %s79
    %p90 = scmp.eq.s32.totalorder %s15, 0
    %p91 = por %p89, %p90
    %p92 = scmp.ne.s32.totalorder %s78, %s79
    %p93 = scmp.eq.s32.totalorder %s16, 1
    %p94 = por %p92, %p93
    %p96 = scmp.ne.s32.totalorder %s79, %s95
    %p97 = scmp.eq.s32.totalorder %s16, 0
    %p98 = por %p96, %p97
    %s99 = ssub.s32 %s17, %s36
    %p100 = scmp.eq.s32.totalorder %s99, 0
    %s102 = sadd.s32 %s101, 1
    %s103 = scalar_select %p100, %s101, %s102
    %p106 = pneg %p100
    %p107 = scmp.eq.s32.totalorder %s10, 1
    %p108 = por %p106, %p107
    %p109 = scmp.ne.s32.totalorder %s101, %s104
    %p110 = scmp.eq.s32.totalorder %s10, 0
    %p111 = por %p109, %p110
    %p112 = scmp.ne.s32.totalorder %s101, %s104
    %p113 = scmp.eq.s32.totalorder %s15, 1
    %p114 = por %p112, %p113
    %p115 = scmp.ne.s32.totalorder %s104, %s105
    %p116 = scmp.eq.s32.totalorder %s15, 0
    %p117 = por %p115, %p116
    %p118 = scmp.ne.s32.totalorder %s104, %s105
    %p119 = scmp.eq.s32.totalorder %s16, 1
    %p120 = por %p118, %p119
    %p122 = scmp.ne.s32.totalorder %s105, %s121
    %p123 = scmp.eq.s32.totalorder %s16, 0
    %p124 = por %p122, %p123
    %s125 = ssub.s32 %s17, %s36
    %p126 = scmp.eq.s32.totalorder %s125, 0
    %s128 = sadd.s32 %s127, 1
    %s129 = scalar_select %p126, %s127, %s128
    %p132 = pneg %p126
    %p133 = scmp.eq.s32.totalorder %s10, 1
    %p134 = por %p132, %p133
    %p135 = scmp.ne.s32.totalorder %s127, %s130
    %p136 = scmp.eq.s32.totalorder %s10, 0
    %p137 = por %p135, %p136
    %p138 = scmp.ne.s32.totalorder %s127, %s130
    %p139 = scmp.eq.s32.totalorder %s15, 1
    %p140 = por %p138, %p139
    %p141 = scmp.ne.s32.totalorder %s130, %s131
    %p142 = scmp.eq.s32.totalorder %s15, 0
    %p143 = por %p141, %p142
    %p144 = scmp.ne.s32.totalorder %s130, %s131
    %p145 = scmp.eq.s32.totalorder %s16, 1
    %p146 = por %p144, %p145
    %p148 = scmp.ne.s32.totalorder %s131, %s147
    %p149 = scmp.eq.s32.totalorder %s16, 0
    %p150 = por %p148, %p149
    %p151 = scmp.le.s32.totalorder 1, %s10
    %p152 = scmp.lt.s32.totalorder %s10, 3
    %p153 = pnand %p151, %p152
    %p154 = pneg %p153
    // Predicated region
    $region9: #{pretrain_loss.1} parent=5 // pred_check
      _
    $region10: #{pretrain_loss.1} parent=5 // pred_check_branch
      %156 = sbr.rel (%p153) target = $region12
    $region11: #{pretrain_loss.1} parent=5 // pred_region
      %s157 = ssub.s32 %s10, 1
    $region12: #{pretrain_loss.1} parent=5 // pred_fallthru
      _
    %p158 = scmp.lt.s32.totalorder %s10, 2
    // Predicated region
    $region13: #{pretrain_loss.1} parent=5 // pred_check
      %p159 = pneg %p158
    $region14: #{pretrain_loss.1} parent=5 // pred_check_branch
      %161 = sbr.rel (%p159) target = $region16
    $region15: #{pretrain_loss.1} parent=5 // pred_region
      // Predicated region
      $region17: #{pretrain_loss.1} parent=15 // pred_check
        %p162 = pneg %p57
      $region18: #{pretrain_loss.1} parent=15 // pred_check_branch
        %164 = sbr.rel (%p162) target = $region20
      $region19: #{pretrain_loss.1} parent=15 // pred_region
        %s165 = sadd.s32 %s17, %s18
        %p166 = scmp.lt.s32.totalorder %s165, 0
        %s167 = scalar_select %p166, %s165, 0
        %s168 = smul.u32 2, %s167
        %p169 = scmp.lt.s32.totalorder %s168, 1
        %s170 = scalar_select %p169, %s168, 1
        %p171 = scmp.lt.s32.totalorder %s19, 0
        %s172 = scalar_select %p171, %s19, 0
        %s173 = sadd.s32 %s172, %s170
        %s174 = smul.addr %s173, 8
        %s175 = scalar_lea.vmem %s0, %s174
        %s176 = sadd.s32 %s17, %s18
        %p177 = scmp.lt.s32.totalorder %s176, 0
        %s178 = scalar_select %p177, %s176, 0
        %s179 = smul.u32 2, %s178
      $region20: #{pretrain_loss.1} parent=15 // pred_fallthru
        _
      // Predicated region
      $region21: #{pretrain_loss.1} parent=15 // pred_check
        %p180 = pneg %p85
      $region22: #{pretrain_loss.1} parent=15 // pred_check_branch
        %182 = sbr.rel (%p180) target = $region24
      $region23: #{pretrain_loss.1} parent=15 // pred_region
        %s183 = sadd.s32 %s17, %s18
        %s184 = smul.u32 2, %s183
        %p185 = scmp.lt.s32.totalorder %s184, 3
        %s186 = scalar_select %p185, %s184, 3
        %s187 = smul.addr %s186, 8
        %s188 = scalar_lea.vmem %s1, %s187
        %s189 = sadd.s32 %s17, %s18
        %s190 = smul.u32 2, %s189
      $region24: #{pretrain_loss.1} parent=15 // pred_fallthru
        _
    $region16: #{pretrain_loss.1} parent=5 // pred_fallthru
      _
    %p191 = scmp.le.s32.totalorder 1, %s10
    %p192 = scmp.lt.s32.totalorder %s10, 3
    %p193 = pnand %p191, %p192
    %p194 = pneg %p193
    // Predicated region
    $region25: #{pretrain_loss.1} parent=5 // pred_check
      _
    $region26: #{pretrain_loss.1} parent=5 // pred_check_branch
      %196 = sbr.rel (%p193) target = $region28
    $region27: #{pretrain_loss.1} parent=5 // pred_region
      %s197 = ssub.s32 %s10, 1
      %s198 = sadd.s32 %s20, %s21
      %p199 = scmp.lt.s32.totalorder %s198, 0
      %s200 = scalar_select %p199, %s198, 0
      %s201 = smul.u32 2, %s200
      %p202 = scmp.lt.s32.totalorder %s201, 1
      %s203 = scalar_select %p202, %s201, 1
      %p204 = scmp.lt.s32.totalorder %s22, 0
      %s205 = scalar_select %p204, %s22, 0
      %s206 = sadd.s32 %s205, %s203
      %s207 = smul.addr %s206, 8
      %s208 = scalar_lea.vmem %s0, %s207
      %p209 = pneg %p63
      %p210 = pneg %p60
      %s211 = sadd.s32 %s20, %s21
      %s212 = smul.u32 2, %s211
      %p213 = scmp.lt.s32.totalorder %s212, 3
      %s214 = scalar_select %p213, %s212, 3
      %s215 = smul.addr %s214, 8
      %s216 = scalar_lea.vmem %s1, %s215
      %p217 = pneg %p91
      %p218 = pneg %p88
      %p219 = pneg %p117
      %p220 = pneg %p114
      %p221 = scmp.lt.s32.totalorder %s20, 1
      %s222 = scalar_select %p221, %s20, 1
      %s223 = smul.addr %s222, 8
      %s224 = scalar_lea.vmem %s2, %s223
      %p225 = pneg %p143
      %p226 = pneg %p140
      %p227 = scmp.lt.s32.totalorder %s20, 1
      %s228 = scalar_select %p227, %s20, 1
      %s229 = smul.addr %s228, 8
      %s230 = scalar_lea.vmem %s3, %s229
      %s231 = sadd.s32 %s20, %s21
      %p232 = scmp.lt.s32.totalorder %s231, 0
      %s233 = scalar_select %p232, %s231, 0
      %s234 = smul.u32 2, %s233
      %p235 = scmp.lt.s32.totalorder %s234, 1
      %s236 = scalar_select %p235, %s234, 1
      %p237 = scmp.lt.s32.totalorder %s22, 0
      %s238 = scalar_select %p237, %s22, 0
      %s239 = sadd.s32 %s238, %s236
      %s240 = smul.addr %s239, 8
      %s241 = scalar_lea.vmem %s0, %s240
      %s242 = sadd.s32 %s20, %s21
      %p243 = scmp.lt.s32.totalorder %s242, 0
      %s244 = scalar_select %p243, %s242, 0
      %s245 = smul.u32 2, %s244
      %s246 = sadd.s32 %s20, %s21
      %s247 = smul.u32 2, %s246
      %p248 = scmp.lt.s32.totalorder %s247, 3
      %s249 = scalar_select %p248, %s247, 3
      %s250 = smul.addr %s249, 8
      %s251 = scalar_lea.vmem %s1, %s250
      %s252 = sadd.s32 %s20, %s21
      %s253 = smul.u32 2, %s252
      %p254 = scmp.lt.s32.totalorder %s20, 1
      %s255 = scalar_select %p254, %s20, 1
      %s256 = smul.addr %s255, 8
      %s257 = scalar_lea.vmem %s2, %s256
      %p258 = scmp.lt.s32.totalorder %s20, 1
      %s259 = scalar_select %p258, %s20, 1
      %s260 = smul.addr %s259, 8
      %s261 = scalar_lea.vmem %s3, %s260
      %p262 = scmp.eq.s32.totalorder %s21, 0
      %p263 = scmp.eq.s32.totalorder %s22, 0
      %p264 = pnand %p262, %p263
      %p265 = pneg %p264
      // Predicated region
      $region29: #{pretrain_loss.1} parent=27 // pred_check
        _
      $region30: #{pretrain_loss.1} parent=27 // pred_check_branch
        %267 = sbr.rel (%p264) target = $region32
      $region31: #{pretrain_loss.1} parent=27 // pred_region
        %vm268 = vcmask 7168
        %269 = vst.msk [vmem:[#allocation5] sm:$0xff] %vm268, 0.0
        %270 = vst.msk [vmem:[#allocation5 + $0x8] sm:$0xff] %vm268, 0.0
        %271 = vst.msk [vmem:[#allocation6] sm:$0xff] %vm268, 0.0
        %272 = vst.msk [vmem:[#allocation6 + $0x8] sm:$0xff] %vm268, 0.0
      $region32: #{pretrain_loss.1} parent=27 // pred_fallthru
        _
      // Predicated region
      $region33: #{pretrain_loss.1} parent=27 // pred_check
        %p273 = pneg %p263
      $region34: #{pretrain_loss.1} parent=27 // pred_check_branch
        %275 = sbr.rel (%p273) target = $region36
      $region35: #{pretrain_loss.1} parent=27 // pred_region
        %vm276 = vcmask 7168
        %277 = vst.msk [vmem:[#allocation2] sm:$0xff] %vm276, -inf
        %278 = vst.msk [vmem:[#allocation2 + $0x8] sm:$0xff] %vm276, -inf
        %279 = vst.msk [vmem:[#allocation3] sm:$0xff] %vm276, 0.0
        %280 = vst.msk [vmem:[#allocation3 + $0x8] sm:$0xff] %vm276, 0.0
        %281 = vst.msk [vmem:[#allocation4] sm:$0xff] %vm276, 0.0
        %282 = vst.msk [vmem:[#allocation4 + $0x8] sm:$0xff] %vm276, 0.0
      $region36: #{pretrain_loss.1} parent=27 // pred_fallthru
        _
      %v283 = vld [vmem:[%s241] sm:$0xff]
      %v284 = vld [vmem:[%s241 + $0x8] sm:$0xff]
      %v285 = vld [vmem:[%s251] sm:$0xff]
      %v286 = vld [vmem:[%s251 + $0x8] sm:$0xff]
      %v287 = vlaneseq
      %v288 = vand.u32 %v287, 127
      %s289 = smul.u32 %s22, 32
      %v290 = vstv %s289
      %v291 = vsub.s32 %v285, %v290
      %v292 = vsub.s32 %v286, %v290
      %vm293 = vcmask 261120
      %v294 = vsel %vm293, %v283, -inf
      %295 = vmax.xlane.f32.xlu0 %v294
      %v296 = vpop.xlane.xlu0 %295
      %v297 = vsel %vm293, %v284, -inf
      %298 = vmax.xlane.f32.xlu0 %v297
      %v299 = vpop.xlane.xlu0 %298
      %300 = vset.pattern.permute.xlu0 0
      %301 = vperm.xlu0 %300, %v291
      %v302 = vpop.permute.xlu0 %301
      %303 = vset.pattern.permute.xlu0 0
      %304 = vperm.xlu0 %303, %v292
      %v305 = vpop.permute.xlu0 %304
      %vm306 = vcmp.eq.s32.totalorder %v288, %v302
      %vm307 = vcmp.eq.s32.totalorder %v288, %v305
      %v308 = vsel %vm306, %v283, 0.0
      %v309 = vsel %vm307, %v284, 0.0
      %v310 = vsel %vm293, %v308, 0.0
      %311 = vadd.xlane.f32.xlu0 %v310
      %v312 = vpop.xlane.xlu0 %311
      %v313 = vsel %vm293, %v309, 0.0
      %314 = vadd.xlane.f32.xlu0 %v313
      %v315 = vpop.xlane.xlu0 %314
      %v316 = vld [vmem:[#allocation4] sm:$0xff]
      %v317 = vld [vmem:[#allocation4 + $0x8] sm:$0xff]
      %v318 = vadd.f32 %v316, %v312
      %v319 = vadd.f32 %v317, %v315
      %vm320 = vcmask 7168
      %321 = vst.msk [vmem:[#allocation4] sm:$0xff] %vm320, %v318
      %322 = vst.msk [vmem:[#allocation4 + $0x8] sm:$0xff] %vm320, %v319
      %v323 = vld [vmem:[#allocation2] sm:$0xff]
      %v324 = vld [vmem:[#allocation2 + $0x8] sm:$0xff]
      %v325 = vmax.f32 %v323, %v296
      %v326 = vmax.f32 %v324, %v299
      %328 = vset.pattern.permute.xlu0 0
      %329 = vperm.xlu0 %328, %v325
      %v330 = vpop.permute.xlu0 %329
      %333 = vset.pattern.permute.xlu0 0
      %334 = vperm.xlu0 %333, %v326
      %v335 = vpop.permute.xlu0 %334
      %v337 = vsub.f32 %v283, %v330
      %v338 = vsub.f32 %v284, %v335
      %v339 = vmul.f32 %v337, 1.442695
      %v340 = vpow.pop %v339
      %v341 = vmul.f32 %v338, 1.442695
      %v342 = vpow.pop %v341
      %v343 = vld [vmem:[#allocation3] sm:$0xff]
      %v344 = vld [vmem:[#allocation3 + $0x8] sm:$0xff]
      %v345 = vsub.f32 %v323, %v325
      %v346 = vsub.f32 %v324, %v326
      %v347 = vmul.f32 %v345, 1.442695
      %v348 = vpow.pop %v347
      %v349 = vmul.f32 %v346, 1.442695
      %v350 = vpow.pop %v349
      %v351 = vmul.f32 %v343, %v348
      %v352 = vmul.f32 %v344, %v350
      %v353 = vsel %vm293, %v340, 0.0
      %354 = vadd.xlane.f32.xlu0 %v353
      %v355 = vpop.xlane.xlu0 %354
      %v356 = vsel %vm293, %v342, 0.0
      %357 = vadd.xlane.f32.xlu0 %v356
      %v358 = vpop.xlane.xlu0 %357
      %v359 = vadd.f32 %v351, %v355
      %v360 = vadd.f32 %v352, %v358
      %361 = vst.msk [vmem:[#allocation3] sm:$0xff] %vm320, %v359
      %362 = vst.msk [vmem:[#allocation3 + $0x8] sm:$0xff] %vm320, %v360
      %363 = vst.msk [vmem:[#allocation2] sm:$0xff] %vm320, %v325
      %364 = vst.msk [vmem:[#allocation2 + $0x8] sm:$0xff] %vm320, %v326
      // Predicated region
      $region37: #{pretrain_loss.1} parent=27 // pred_check
        %p365 = pneg %p263
      $region38: #{pretrain_loss.1} parent=27 // pred_check_branch
        %367 = sbr.rel (%p365) target = $region40
      $region39: #{pretrain_loss.1} parent=27 // pred_region
        %v368 = vld [vmem:[#allocation2] sm:$0xff]
        %v369 = vld [vmem:[#allocation2 + $0x8] sm:$0xff]
        %v370 = vld [vmem:[#allocation3] sm:$0xff]
        %v371 = vld [vmem:[#allocation3 + $0x8] sm:$0xff]
        %v372 = vlog2.pop %v370
        %v373 = vmul.f32 %v372, 0.6931472
        %v374 = vlog2.pop %v371
        %v375 = vmul.f32 %v374, 0.6931472
        %v376 = vadd.f32 %v368, %v373
        %v377 = vadd.f32 %v369, %v375
        %v378 = vld [vmem:[#allocation4] sm:$0xff]
        %v379 = vld [vmem:[#allocation4 + $0x8] sm:$0xff]
        %v380 = vsub.f32 %v376, %v378
        %v381 = vsub.f32 %v377, %v379
        %vm382 = vcmp.ne.s32.totalorder %v285, 4294967196
        %vm383 = vcmp.ne.s32.totalorder %v286, 4294967196
        %v384 = vld [vmem:[#allocation5] sm:$0xff]
        %v385 = vld [vmem:[#allocation5 + $0x8] sm:$0xff]
        %v386 = vsel %vm382, %v380, 0.0
        %v387 = vsel %vm383, %v381, 0.0
        %v388 = vadd.f32 %v384, %v386
        %v389 = vadd.f32 %v385, %v387
        %390 = vst.msk [vmem:[#allocation5] sm:$0xff] %vm320, %v388
        %391 = vst.msk [vmem:[#allocation5 + $0x8] sm:$0xff] %vm320, %v389
        %v392 = vld [vmem:[#allocation6] sm:$0xff]
        %v393 = vld [vmem:[#allocation6 + $0x8] sm:$0xff]
        %v394 = vsel %vm382, 1, 0
        %v395 = vsel %vm383, 1, 0
        %v396 = vcvt.s32.f32 %v394
        %v397 = vcvt.s32.f32 %v395
        %v398 = vadd.f32 %v392, %v396
        %v399 = vadd.f32 %v393, %v397
        %400 = vst.msk [vmem:[#allocation6] sm:$0xff] %vm320, %v398
        %401 = vst.msk [vmem:[#allocation6 + $0x8] sm:$0xff] %vm320, %v399
      $region40: #{pretrain_loss.1} parent=27 // pred_fallthru
        _
      // Predicated region
      $region41: #{pretrain_loss.1} parent=27 // pred_check
        _
      $region42: #{pretrain_loss.1} parent=27 // pred_check_branch
        %403 = sbr.rel (%p264) target = $region44
      $region43: #{pretrain_loss.1} parent=27 // pred_region
        %v404 = vld [vmem:[#allocation5] sm:$0xff]
        %v405 = vld [vmem:[#allocation5 + $0x8] sm:$0xff]
        %v406 = vsel %vm320, %v404, 0.0
        %v407 = vsel %vm320, %v405, 0.0
        %v408 = vadd.f32 %v406, %v407
        %409 = vadd.xlane.f32.xlu0 %v408
        %v410 = vpop.xlane.xlu0 %409
        %v411 = vrot.slane %v410, 4
        %v412 = vadd.f32 %v410, %v411
        %v413 = vrot.slane %v412, 2
        %v414 = vadd.f32 %v412, %v413
        %v415 = vrot.slane %v414, 1
        %v416 = vadd.f32 %v414, %v415
        %s417 = vtos %v416
        %v418 = vstv %s417
        %419 = vst [vmem:[%s257] sm:$0xff] %v418
        %v420 = vld [vmem:[#allocation6] sm:$0xff]
        %v421 = vld [vmem:[#allocation6 + $0x8] sm:$0xff]
        %v422 = vsel %vm320, %v420, 0.0
        %v423 = vsel %vm320, %v421, 0.0
        %v424 = vadd.f32 %v422, %v423
        %425 = vadd.xlane.f32.xlu0 %v424
        %v426 = vpop.xlane.xlu0 %425
        %v427 = vrot.slane %v426, 4
        %v428 = vadd.f32 %v426, %v427
        %v429 = vrot.slane %v428, 2
        %v430 = vadd.f32 %v428, %v429
        %v431 = vrot.slane %v430, 1
        %v432 = vadd.f32 %v430, %v431
        %s433 = vtos %v432
        %v434 = vstv %s433
        %435 = vst [vmem:[%s261] sm:$0xff] %v434
      $region44: #{pretrain_loss.1} parent=27 // pred_fallthru
        _
      %p436 = scmp.lt.s32.totalorder %s20, 1
      %s437 = scalar_select %p436, %s20, 1
      %s438 = smul.addr %s437, 8
      %s439 = scalar_lea.vmem %s2, %s438
      %p440 = scmp.lt.s32.totalorder %s20, 1
      %s441 = scalar_select %p440, %s20, 1
      %s442 = smul.addr %s441, 8
      %s443 = scalar_lea.vmem %s3, %s442
      // Predicated region
      $region45: #{pretrain_loss.1} parent=27 // pred_check
        %p444 = pneg %p114
      $region46: #{pretrain_loss.1} parent=27 // pred_check_branch
        %446 = sbr.rel (%p444) target = $region48
      $region47: #{pretrain_loss.1} parent=27 // pred_region
        _
      $region48: #{pretrain_loss.1} parent=27 // pred_fallthru
        _
      // Predicated region
      $region49: #{pretrain_loss.1} parent=27 // pred_check
        %p447 = pneg %p140
      $region50: #{pretrain_loss.1} parent=27 // pred_check_branch
        %449 = sbr.rel (%p447) target = $region52
      $region51: #{pretrain_loss.1} parent=27 // pred_region
        _
      $region52: #{pretrain_loss.1} parent=27 // pred_fallthru
        _
    $region28: #{pretrain_loss.1} parent=5 // pred_fallthru
      _
    %p450 = scmp.le.s32.totalorder 2, %s10
    // Predicated region
    $region53: #{pretrain_loss.1} parent=5 // pred_check
      %p451 = pneg %p450
    $region54: #{pretrain_loss.1} parent=5 // pred_check_branch
      %453 = sbr.rel (%p451) target = $region56
    $region55: #{pretrain_loss.1} parent=5 // pred_region
      %s454 = ssub.s32 %s10, 2
      // Predicated region
      $region57: #{pretrain_loss.1} parent=55 // pred_check
        %p455 = pneg %p120
      $region58: #{pretrain_loss.1} parent=55 // pred_check_branch
        %457 = sbr.rel (%p455) target = $region60
      $region59: #{pretrain_loss.1} parent=55 // pred_region
        %p458 = scmp.lt.s32.totalorder %s23, 1
        %s459 = scalar_select %p458, %s23, 1
        %s460 = smul.addr %s459, 8
        %s461 = scalar_lea.vmem %s2, %s460
      $region60: #{pretrain_loss.1} parent=55 // pred_fallthru
        _
      // Predicated region
      $region61: #{pretrain_loss.1} parent=55 // pred_check
        %p462 = pneg %p146
      $region62: #{pretrain_loss.1} parent=55 // pred_check_branch
        %464 = sbr.rel (%p462) target = $region64
      $region63: #{pretrain_loss.1} parent=55 // pred_region
        %p465 = scmp.lt.s32.totalorder %s23, 1
        %s466 = scalar_select %p465, %s23, 1
        %s467 = smul.addr %s466, 8
        %s468 = scalar_lea.vmem %s3, %s467
      $region64: #{pretrain_loss.1} parent=55 // pred_fallthru
        _
    $region56: #{pretrain_loss.1} parent=5 // pred_fallthru
      _
  $region6: #{pretrain_loss.1} parent=0 // loop_footer
    %s14 = sadd.s32 1, %s10
  $region7: #{pretrain_loss.1} parent=0 // loop_footer_branch
    %9 = sbr.rel target = $region3
  $region8: #{pretrain_loss.1} parent=0 // loop_exit
    _

</llo_original>
